<compile_context>
chip_gen: v5e
topology: v5e:2x2
jax: 0.10.0
libtpu: 0.0.40
codegen_flags: <defaults>
</compile_context>

<pallas_src>
import functools

import jax
import jax.numpy as jnp
from jax import lax
from jax.experimental import pallas as pl
from jax.experimental.pallas import tpu as pltpu


def _round_up(x, m):
    return (x + m - 1) // m * m


def _final_conv_kernel(w_ref, b_ref, xm_ref, xh_ref, o_ref, *, kh, kw, w_p, tq):
    """One (batch, spatial-tile) block of the fused conv + sigmoid.

    w_ref:  (Cout_p, K)         weights, K = kh*kw*Cin (tap-major, channel-minor)
    b_ref:  (Cout_p, 1)         f32 bias
    xm_ref: (1, Cin, tq)        main flat-input tile   (elements [q0, q0+tq))
    xh_ref: (1, Cin, halo_pad)  lane halo              (elements [q0+tq, q0+tq+halo_pad))
    o_ref:  (1, Cout_p, tq)     lane-dense output tile (wide-flattened NCHW order)
    """
    # Tile + halo window; both pieces are 128-lane multiples so this concat is a
    # cheap, layout-preserving copy.
    xwin = jnp.concatenate([xm_ref[0], xh_ref[0]], axis=-1)        # (Cin, tq + halo_pad)

    # In-VMEM im2col: kh*kw statically shifted windows stacked on sublanes.
    taps = [xwin[:, i * w_p + j: i * w_p + j + tq]
            for i in range(kh) for j in range(kw)]                 # each (Cin, tq)
    patches = jnp.concatenate(taps, axis=0)                        # (K, tq)

    # Single fused-K MXU matmul, f32 accumulation, lane-dense (Cout_p, tq) result.
    acc = jnp.dot(w_ref[...], patches, preferred_element_type=jnp.float32)
    acc = acc + b_ref[...]                                         # (Cout_p, 1) broadcast

    # Exact sigmoid as one EUP transcendental (no approximate reciprocal).
    y = 0.5 * jnp.tanh(0.5 * acc) + 0.5
    o_ref[0] = y.astype(o_ref.dtype)


def final_conv_block(x_nchw, weight, bias, *, stride=1, padding=1):
    """x_nchw: (N, Cin, H, W); weight: (Cout, Cin, KH, KW) (PyTorch layout);
    bias: (Cout,).  Returns sigmoid(conv2d(x)) of shape (N, Cout, H_out, W_out)."""
    # TODO(synk): stride > 1 would need a strided flat gather of the patch rows;
    # the wnet FinalConvBlock instantiation uses stride=1.
    assert stride == 1, "this instantiation uses stride=1"
    n, cin, h, w = x_nchw.shape
    cout, cin_w, kh, kw = weight.shape
    assert cin_w == cin

    h_out = h + 2 * padding - kh + 1
    w_out = w + 2 * padding - kw + 1
    h_p = h + 2 * padding                      # = h_out + kh - 1
    w_p = w + 2 * padding                      # = w_out + kw - 1
    x_dt = x_nchw.dtype

    # ---- glue (~1x input traffic): spatial zero-pad, flatten (H_p, W_p) ----
    x_pad = jnp.pad(x_nchw, ((0, 0), (0, 0), (padding, padding), (padding, padding)))
    x_flat = x_pad.reshape(n, cin, h_p * w_p)

    # Wide flattened output grid: q = oh*w_p + ow, valid columns ow < w_out.  For
    # stride 1 this makes every conv tap a constant lane shift of x_flat
    # (shift = i*w_p + j), i.e. im2col becomes static slices inside the kernel.
    q_total = h_out * w_p
    halo = (kh - 1) * w_p + (kw - 1)
    halo_pad = _round_up(max(halo, 1), 128)

    cout_p = _round_up(cout, 8)                # full (8,128) f32 store tiles
    k_dim = kh * kw * cin
    bx = jnp.dtype(x_dt).itemsize

    # Balanced lane tiling: tq is a multiple of halo_pad (so the halo block is
    # addressable with plain Blocked indexing) and sized from a VMEM budget;
    # the tile count is chosen first so the last tile is not mostly padding.
    bytes_per_lane = 4 * cin * bx + 2 * cout_p * bx + k_dim * bx + 4 * cout_p
    vmem_budget = 16 * 1024 * 1024
    tq_cap = max(halo_pad, (vmem_budget // bytes_per_lane) // halo_pad * halo_pad)
    n_tiles = pl.cdiv(q_total, tq_cap)
    if n == 1 and n_tiles == 1:
        n_tiles = 2                            # keep both v7x TensorCores busy
    tq = _round_up(pl.cdiv(q_total, n_tiles), halo_pad)
    q_pad = n_tiles * tq
    l_pad = q_pad + halo_pad                   # covers the last tile's halo reads

    x_flat = jnp.pad(x_flat, ((0, 0), (0, 0), (0, l_pad - h_p * w_p)))

    # Fused weights (Cout_p, K), K ordered (kh, kw, cin) to match the tap concat.
    w2 = jnp.transpose(weight, (0, 2, 3, 1)).reshape(cout, k_dim).astype(x_dt)
    b2 = bias.reshape(cout, 1).astype(jnp.float32)
    if cout_p != cout:
        w2 = jnp.pad(w2, ((0, cout_p - cout), (0, 0)))
        b2 = jnp.pad(b2, ((0, cout_p - cout), (0, 0)))

    ratio = tq // halo_pad                     # exact by construction
    kern = functools.partial(_final_conv_kernel, kh=kh, kw=kw, w_p=w_p, tq=tq)

    out = pl.pallas_call(
        kern,
        out_shape=jax.ShapeDtypeStruct((n, cout_p, q_pad), x_dt),
        grid_spec=pltpu.PrefetchScalarGridSpec(
            num_scalar_prefetch=0,
            grid=(n, n_tiles),
            in_specs=[
                pl.BlockSpec((cout_p, k_dim), lambda b, s: (0, 0)),
                pl.BlockSpec((cout_p, 1), lambda b, s: (0, 0)),
                pl.BlockSpec((1, cin, tq), lambda b, s: (b, 0, s)),
                pl.BlockSpec((1, cin, halo_pad), lambda b, s: (b, 0, (s + 1) * ratio)),
            ],
            out_specs=pl.BlockSpec((1, cout_p, tq), lambda b, s: (b, 0, s)),
        ),
        compiler_params=pltpu.CompilerParams(
            dimension_semantics=("parallel", "parallel"),
            vmem_limit_bytes=32 * 1024 * 1024),
    )(w2, b2, x_flat, x_flat)

    # Drop channel padding, spatial tail padding and the garbage "wide" columns.
    out = out[:, :cout, :h_out * w_p].reshape(n, cout, h_out, w_p)
    return out[:, :, :, :w_out]


def _reference(x_nchw, weight, bias, *, padding=1):
    y = lax.conv_general_dilated(
        x_nchw, weight, window_strides=(1, 1),
        padding=[(padding, padding), (padding, padding)],
        dimension_numbers=("NCHW", "OIHW", "NCHW"))
    y = y + bias.reshape(1, -1, 1, 1)
    return jax.nn.sigmoid(y)


if __name__ == "__main__":
    # Small deterministic config: batch=2, in_channels=4, out_channels=8,
    # spatial 16x16, kernel 3x3, stride 1, padding 1, activation = sigmoid.
    key = jax.random.PRNGKey(0)
    kx, kw_, kb = jax.random.split(key, 3)

    N, CIN, H, W = 2, 4, 16, 16
    COUT, KH, KW = 8, 3, 3

    x = jax.random.normal(kx, (N, CIN, H, W), dtype=jnp.float32)
    weight = 0.1 * jax.random.normal(kw_, (COUT, CIN, KH, KW), dtype=jnp.float32)
    bias = 0.1 * jax.random.normal(kb, (COUT,), dtype=jnp.float32)

    out = final_conv_block(x, weight, bias, stride=1, padding=1)
    out = jax.block_until_ready(out)

    ref = _reference(x, weight, bias, padding=1)
    assert out.shape == ref.shape == (N, COUT, H, W)
    # Small margin for MXU f32 multi-pass / transcendental rounding on hardware.
    assert jnp.allclose(out, ref, atol=2e-3, rtol=2e-3), "mismatch vs XLA conv reference"

    print("KERNEL_OK")
</pallas_src>

<mosaic_0001>
module attributes {stable_mosaic.version = 11 : i64} {
  func.func @_final_conv_kernel(%arg0: i32, %arg1: i32, %arg2: memref<8x36xf32, #tpu.memory_space<vmem>>, %arg3: memref<8x1xf32, #tpu.memory_space<vmem>>, %arg4: memref<1x4x384xf32, #tpu.memory_space<vmem>>, %arg5: memref<1x4x128xf32, #tpu.memory_space<vmem>>, %arg6: memref<1x8x384xf32, #tpu.memory_space<vmem>>) attributes {dimension_semantics = [#tpu.dimension_semantics<parallel>, #tpu.dimension_semantics<parallel>], iteration_bounds = array<i64: 2, 1>, scalar_prefetch = 0 : i64, scratch_operands = 0 : i64, tpu.core_type = #tpu.core_type<tc>, window_params = [{pipeline_mode = #tpu.pipeline_mode<synchronous>, transform_indices = @transform_0, window_bounds = array<i64: 8, 36>}, {pipeline_mode = #tpu.pipeline_mode<synchronous>, transform_indices = @transform_1, window_bounds = array<i64: 8, 1>}, {transform_indices = @transform_2, window_bounds = array<i64: 1, 4, 384>}, {transform_indices = @transform_3, window_bounds = array<i64: 1, 4, 128>}, {transform_indices = @transform_4, window_bounds = array<i64: 1, 8, 384>}]} {
    %c0 = arith.constant 0 : index
    %c0_0 = arith.constant 0 : index
    %c0_1 = arith.constant 0 : index
    %0 = vector.load %arg4[%c0, %c0_0, %c0_1] : memref<1x4x384xf32, #tpu.memory_space<vmem>>, vector<1x4x384xf32>
    %1 = vector.shape_cast %0 : vector<1x4x384xf32> to vector<4x384xf32>
    %c0_2 = arith.constant 0 : index
    %c0_3 = arith.constant 0 : index
    %c0_4 = arith.constant 0 : index
    %2 = vector.load %arg5[%c0_2, %c0_3, %c0_4] : memref<1x4x128xf32, #tpu.memory_space<vmem>>, vector<1x4x128xf32>
    %3 = vector.shape_cast %2 : vector<1x4x128xf32> to vector<4x128xf32>
    %4 = tpu.concatenate %1, %3 in 1 : vector<4x384xf32>, vector<4x128xf32> -> vector<4x512xf32>
    %5 = vector.extract_strided_slice %4 {offsets = [0, 0], sizes = [4, 384], strides = [1, 1]} : vector<4x512xf32> to vector<4x384xf32>
    %6 = vector.extract_strided_slice %4 {offsets = [0, 1], sizes = [4, 384], strides = [1, 1]} : vector<4x512xf32> to vector<4x384xf32>
    %7 = vector.extract_strided_slice %4 {offsets = [0, 2], sizes = [4, 384], strides = [1, 1]} : vector<4x512xf32> to vector<4x384xf32>
    %8 = vector.extract_strided_slice %4 {offsets = [0, 18], sizes = [4, 384], strides = [1, 1]} : vector<4x512xf32> to vector<4x384xf32>
    %9 = vector.extract_strided_slice %4 {offsets = [0, 19], sizes = [4, 384], strides = [1, 1]} : vector<4x512xf32> to vector<4x384xf32>
    %10 = vector.extract_strided_slice %4 {offsets = [0, 20], sizes = [4, 384], strides = [1, 1]} : vector<4x512xf32> to vector<4x384xf32>
    %11 = vector.extract_strided_slice %4 {offsets = [0, 36], sizes = [4, 384], strides = [1, 1]} : vector<4x512xf32> to vector<4x384xf32>
    %12 = vector.extract_strided_slice %4 {offsets = [0, 37], sizes = [4, 384], strides = [1, 1]} : vector<4x512xf32> to vector<4x384xf32>
    %13 = vector.extract_strided_slice %4 {offsets = [0, 38], sizes = [4, 384], strides = [1, 1]} : vector<4x512xf32> to vector<4x384xf32>
    %14 = tpu.concatenate %5, %6, %7, %8, %9, %10, %11, %12, %13 in 0 : vector<4x384xf32>, vector<4x384xf32>, vector<4x384xf32>, vector<4x384xf32>, vector<4x384xf32>, vector<4x384xf32>, vector<4x384xf32>, vector<4x384xf32>, vector<4x384xf32> -> vector<36x384xf32>
    %c0_5 = arith.constant 0 : index
    %c0_6 = arith.constant 0 : index
    %15 = vector.load %arg2[%c0_5, %c0_6] : memref<8x36xf32, #tpu.memory_space<vmem>>, vector<8x36xf32>
    %cst = arith.constant dense<0.000000e+00> : vector<8x384xf32>
    %16 = tpu.matmul %15, %14, %cst {dimension_numbers = #tpu.dot_dimension_numbers<[1], [0], [0], [1], [0, 0, 1, 1], [], []>} : vector<8x36xf32>, vector<36x384xf32>, vector<8x384xf32> -> vector<8x384xf32>
    %c0_7 = arith.constant 0 : index
    %c0_8 = arith.constant 0 : index
    %17 = vector.load %arg3[%c0_7, %c0_8] : memref<8x1xf32, #tpu.memory_space<vmem>>, vector<8x1xf32>
    %18 = vector.broadcast %17 : vector<8x1xf32> to vector<8x384xf32>
    %19 = arith.addf %16, %18 : vector<8x384xf32>
    %cst_9 = arith.constant 5.000000e-01 : f32
    %20 = vector.broadcast %cst_9 : f32 to vector<8x384xf32>
    %21 = arith.mulf %20, %19 : vector<8x384xf32>
    %22 = math.tanh %21 : vector<8x384xf32>
    %cst_10 = arith.constant 5.000000e-01 : f32
    %23 = vector.broadcast %cst_10 : f32 to vector<8x384xf32>
    %24 = arith.mulf %23, %22 : vector<8x384xf32>
    %cst_11 = arith.constant 5.000000e-01 : f32
    %25 = vector.broadcast %cst_11 : f32 to vector<8x384xf32>
    %26 = arith.addf %24, %25 : vector<8x384xf32>
    %c0_12 = arith.constant 0 : index
    %c0_13 = arith.constant 0 : index
    %c0_14 = arith.constant 0 : index
    %27 = vector.load %arg6[%c0_12, %c0_13, %c0_14] : memref<1x8x384xf32, #tpu.memory_space<vmem>>, vector<1x8x384xf32>
    %28 = vector.shape_cast %27 : vector<1x8x384xf32> to vector<8x384xf32>
    %29 = vector.shape_cast %26 : vector<8x384xf32> to vector<1x8x384xf32>
    tpu.vector_store %arg6[%c0_12, %c0_13, %c0_14], %29 {strides = array<i32>} : memref<1x8x384xf32, #tpu.memory_space<vmem>>, vector<1x8x384xf32>,
    return
  }
  func.func @transform_0(%arg0: i32, %arg1: i32) -> (i32, i32) {
    %c0_i32 = arith.constant 0 : i32
    %c0_i32_0 = arith.constant 0 : i32
    %c0_i32_1 = arith.constant 0 : i32
    return %c0_i32, %c0_i32_0 : i32, i32
  }
  func.func @transform_1(%arg0: i32, %arg1: i32) -> (i32, i32) {
    %c0_i32 = arith.constant 0 : i32
    %c0_i32_0 = arith.constant 0 : i32
    %c0_i32_1 = arith.constant 0 : i32
    return %c0_i32, %c0_i32_0 : i32, i32
  }
  func.func @transform_2(%arg0: i32, %arg1: i32) -> (i32, i32, i32) {
    %c0_i32 = arith.constant 0 : i32
    %c0_i32_0 = arith.constant 0 : i32
    return %arg0, %c0_i32, %arg1 : i32, i32, i32
  }
  func.func @transform_3(%arg0: i32, %arg1: i32) -> (i32, i32, i32) {
    %c1_i32 = arith.constant 1 : i32
    %0 = arith.addi %arg1, %c1_i32 : i32
    %c3_i32 = arith.constant 3 : i32
    %1 = arith.muli %0, %c3_i32 : i32
    %c0_i32 = arith.constant 0 : i32
    %c0_i32_0 = arith.constant 0 : i32
    return %arg0, %c0_i32, %1 : i32, i32, i32
  }
  func.func @transform_4(%arg0: i32, %arg1: i32) -> (i32, i32, i32) {
    %c0_i32 = arith.constant 0 : i32
    %c0_i32_0 = arith.constant 0 : i32
    return %arg0, %c0_i32, %arg1 : i32, i32, i32
  }
}

</mosaic_0001>

<llo_original>
// kernel: tpu_custom_call.1
$region0: #{tpu_custom_call.1}
  #allocation0 [shape = 'u32[]', space=smem, size = 0x4, offset = 0x4, fixed_abs, tag = 'smem constant byte address 0x4 - core index']
  #allocation1 [shape = 'u32[72,128]{1,0:T(1,128)}', space=vmem, size = 0x9000, scoped, tag = 'internal scratch']
  %s0 = inlined_call_operand.vmem [shape: f32[8,36], index: 0, kind: input, shape index: {}]
  %s1 = inlined_call_operand.vmem [shape: f32[8,1], index: 1, kind: input, shape index: {}]
  %s2 = inlined_call_operand.hbm [shape: f32[2,4,512], index: 2, kind: input, shape index: {}]
  %s3 = inlined_call_operand.hbm [shape: f32[2,4,512], index: 3, kind: input, shape index: {}]
  %s4 = inlined_call_operand.hbm [shape: f32[2,8,384], index: 4, kind: output, shape index: {}]
  %s5 = sld [smem:[#allocation0]]
  $region57: #{tpu_custom_call.1} parent=0
    _
  %s7 = ssub.s32 1, %s5
  %s8 = scalar_select 0, %s7, %s5
  $region1: #{tpu_custom_call.1} parent=0
    #allocation2 [shape = 'u8[12288]{0}', space=vmem, size = 0x3000, scoped, tag = 'input window, operand 2']
    #allocation3 [shape = 's32[2]{0}', space=sflag, size = 0x8, scoped, tag = 'scoped memory for tpu_custom_call.1']
    #allocation4 [shape = 's32[2]{0}', space=sflag, size = 0x8, scoped, tag = 'scoped memory for tpu_custom_call.1']
    #allocation5 [shape = 'u8[4096]{0}', space=vmem, size = 0x1000, scoped, tag = 'input window, operand 3']
    #allocation6 [shape = 's32[2]{0}', space=sflag, size = 0x8, scoped, tag = 'scoped memory for tpu_custom_call.1']
    #allocation7 [shape = 'u8[24576]{0}', space=vmem, size = 0x6000, scoped, tag = 'output window, operand 0']
    %9 = vsyncpa [#allocation3], 0
    %s10 = scalar_lea.sflag [#allocation3], 1
    %11 = vsyncpa %s10, 0
    %12 = vsyncpa [#allocation6], 0
    %s13 = scalar_lea.sflag [#allocation6], 1
    %14 = vsyncpa %s13, 0
    %15 = vsyncpa [#allocation4], 0
    %s16 = scalar_lea.sflag [#allocation4], 1
    %17 = vsyncpa %s16, 0
    loop: start=0, step=1, limit=4
    $region2: #{tpu_custom_call.1} parent=1 // loop_pre_header
      _
    $region3: #{tpu_custom_call.1} parent=1 // loop_header
      %s19 = sphi 0, %s23
      %p20 = scmp.ge.s32.totalorder %s19, 4
      %s26 = sphi 0, %s38
      %s27 = sphi 0, %s34
      %s28 = sphi 0, %s26
      %s29 = sphi 0, %s27
      %s30 = sphi 0, %s28
      %s31 = sphi 0, %s29
      %s39 = sphi 0, %s39
      %s41 = sphi 0, %s39
      %s42 = sphi 0, %s41
      %s56 = sphi 0, %s42
      %s60 = sphi 0, %s60
      %s62 = sphi 0, %s60
      %s63 = sphi 0, %s62
      %s77 = sphi 0, %s63
      %s85 = sphi 0, %s87
      %s88 = sphi 0, %s85
      %s89 = sphi 0, %s88
      %s105 = sphi 0, %s89
      %s117 = sphi 0, %s119
      %s120 = sphi 0, %s117
      %s121 = sphi 0, %s120
      %s137 = sphi 0, %s121
      %s145 = sphi 0, %s147
      %s148 = sphi 0, %s145
      %s149 = sphi 0, %s148
      %s165 = sphi 0, %s149
    $region4: #{tpu_custom_call.1} parent=1 // loop_header_branch
      %22 = sbr.rel (%p20) target = $region8
    $region5: #{tpu_custom_call.1} parent=1 // loop_body
      %s24 = ssub.s32 %s19, 1
      %s25 = ssub.s32 %s19, 2
      %s32 = sadd.s32 1, %s27
      %p33 = scmp.ge.s32.totalorder %s32, 1
      %s34 = scalar_select %p33, 0, %s32
      %s35 = sadd.s32 1, %s26
      %s36 = scalar_select %p33, %s35, %s26
      %p37 = scmp.ge.s32.totalorder %s36, 2
      %s38 = scalar_select %p37, 0, %s36
      %s40 = sadd.s32 %s39, 1
      %p43 = scmp.eq.s32.totalorder %s19, 1
      %p44 = scmp.ne.s32.totalorder %s39, %s41
      %p45 = scmp.eq.s32.totalorder %s19, 0
      %p46 = por %p44, %p45
      %p47 = scmp.ne.s32.totalorder %s39, %s41
      %p48 = scmp.eq.s32.totalorder %s24, 1
      %p49 = por %p47, %p48
      %p50 = scmp.ne.s32.totalorder %s41, %s42
      %p51 = scmp.eq.s32.totalorder %s24, 0
      %p52 = por %p50, %p51
      %p53 = scmp.ne.s32.totalorder %s41, %s42
      %p54 = scmp.eq.s32.totalorder %s25, 1
      %p55 = por %p53, %p54
      %p57 = scmp.ne.s32.totalorder %s42, %s56
      %p58 = scmp.eq.s32.totalorder %s25, 0
      %p59 = por %p57, %p58
      %s61 = sadd.s32 %s60, 1
      %p64 = scmp.eq.s32.totalorder %s19, 1
      %p65 = scmp.ne.s32.totalorder %s60, %s62
      %p66 = scmp.eq.s32.totalorder %s19, 0
      %p67 = por %p65, %p66
      %p68 = scmp.ne.s32.totalorder %s60, %s62
      %p69 = scmp.eq.s32.totalorder %s24, 1
      %p70 = por %p68, %p69
      %p71 = scmp.ne.s32.totalorder %s62, %s63
      %p72 = scmp.eq.s32.totalorder %s24, 0
      %p73 = por %p71, %p72
      %p74 = scmp.ne.s32.totalorder %s62, %s63
      %p75 = scmp.eq.s32.totalorder %s25, 1
      %p76 = por %p74, %p75
      %p78 = scmp.ne.s32.totalorder %s63, %s77
      %p79 = scmp.eq.s32.totalorder %s25, 0
      %p80 = por %p78, %p79
      %s81 = ssub.s32 %s26, %s38
      %s82 = ssub.s32 %s27, %s34
      %s83 = sor.u32 %s81, %s82
      %p84 = scmp.eq.s32.totalorder %s83, 0
      %s86 = sadd.s32 %s85, 1
      %s87 = scalar_select %p84, %s85, %s86
      %p90 = pneg %p84
      %p91 = scmp.eq.s32.totalorder %s19, 1
      %p92 = por %p90, %p91
      %p93 = scmp.ne.s32.totalorder %s85, %s88
      %p94 = scmp.eq.s32.totalorder %s19, 0
      %p95 = por %p93, %p94
      %p96 = scmp.ne.s32.totalorder %s85, %s88
      %p97 = scmp.eq.s32.totalorder %s24, 1
      %p98 = por %p96, %p97
      %p99 = scmp.ne.s32.totalorder %s88, %s89
      %p100 = scmp.eq.s32.totalorder %s24, 0
      %p101 = por %p99, %p100
      %p102 = scmp.ne.s32.totalorder %s88, %s89
      %p103 = scmp.eq.s32.totalorder %s25, 1
      %p104 = por %p102, %p103
      %p106 = scmp.ne.s32.totalorder %s89, %s105
      %p107 = scmp.eq.s32.totalorder %s25, 0
      %p108 = por %p106, %p107
      %s109 = sadd.s32 %s27, 1
      %s110 = smul.u32 %s109, 3
      %s111 = sadd.s32 %s34, 1
      %s112 = smul.u32 %s111, 3
      %s113 = ssub.s32 %s26, %s38
      %s114 = ssub.s32 %s110, %s112
      %s115 = sor.u32 %s113, %s114
      %p116 = scmp.eq.s32.totalorder %s115, 0
      %s118 = sadd.s32 %s117, 1
      %s119 = scalar_select %p116, %s117, %s118
      %p122 = pneg %p116
      %p123 = scmp.eq.s32.totalorder %s19, 1
      %p124 = por %p122, %p123
      %p125 = scmp.ne.s32.totalorder %s117, %s120
      %p126 = scmp.eq.s32.totalorder %s19, 0
      %p127 = por %p125, %p126
      %p128 = scmp.ne.s32.totalorder %s117, %s120
      %p129 = scmp.eq.s32.totalorder %s24, 1
      %p130 = por %p128, %p129
      %p131 = scmp.ne.s32.totalorder %s120, %s121
      %p132 = scmp.eq.s32.totalorder %s24, 0
      %p133 = por %p131, %p132
      %p134 = scmp.ne.s32.totalorder %s120, %s121
      %p135 = scmp.eq.s32.totalorder %s25, 1
      %p136 = por %p134, %p135
      %p138 = scmp.ne.s32.totalorder %s121, %s137
      %p139 = scmp.eq.s32.totalorder %s25, 0
      %p140 = por %p138, %p139
      %s141 = ssub.s32 %s26, %s38
      %s142 = ssub.s32 %s27, %s34
      %s143 = sor.u32 %s141, %s142
      %p144 = scmp.eq.s32.totalorder %s143, 0
      %s146 = sadd.s32 %s145, 1
      %s147 = scalar_select %p144, %s145, %s146
      %p150 = pneg %p144
      %p151 = scmp.eq.s32.totalorder %s19, 1
      %p152 = por %p150, %p151
      %p153 = scmp.ne.s32.totalorder %s145, %s148
      %p154 = scmp.eq.s32.totalorder %s19, 0
      %p155 = por %p153, %p154
      %p156 = scmp.ne.s32.totalorder %s145, %s148
      %p157 = scmp.eq.s32.totalorder %s24, 1
      %p158 = por %p156, %p157
      %p159 = scmp.ne.s32.totalorder %s148, %s149
      %p160 = scmp.eq.s32.totalorder %s24, 0
      %p161 = por %p159, %p160
      %p162 = scmp.ne.s32.totalorder %s148, %s149
      %p163 = scmp.eq.s32.totalorder %s25, 1
      %p164 = por %p162, %p163
      %p166 = scmp.ne.s32.totalorder %s149, %s165
      %p167 = scmp.eq.s32.totalorder %s25, 0
      %p168 = por %p166, %p167
      %p169 = scmp.le.s32.totalorder 1, %s19
      %p170 = scmp.lt.s32.totalorder %s19, 3
      %p171 = pnand %p169, %p170
      %p172 = pneg %p171
      // Predicated region
      $region9: #{tpu_custom_call.1} parent=5 // pred_check
        _
      $region10: #{tpu_custom_call.1} parent=5 // pred_check_branch
        %174 = sbr.rel (%p171) target = $region12
      $region11: #{tpu_custom_call.1} parent=5 // pred_region
        %s175 = ssub.s32 %s19, 1
        // Predicated region
        $region13: #{tpu_custom_call.1} parent=11 // pred_check
          %p176 = pneg %p52
        $region14: #{tpu_custom_call.1} parent=11 // pred_check_branch
          %178 = sbr.rel (%p176) target = $region16
        $region15: #{tpu_custom_call.1} parent=11 // pred_region
          _
        $region16: #{tpu_custom_call.1} parent=11 // pred_fallthru
          _
        // Predicated region
        $region17: #{tpu_custom_call.1} parent=11 // pred_check
          %p179 = pneg %p73
        $region18: #{tpu_custom_call.1} parent=11 // pred_check_branch
          %181 = sbr.rel (%p179) target = $region20
        $region19: #{tpu_custom_call.1} parent=11 // pred_region
          _
        $region20: #{tpu_custom_call.1} parent=11 // pred_fallthru
          _
      $region12: #{tpu_custom_call.1} parent=5 // pred_fallthru
        _
      %p182 = scmp.lt.s32.totalorder %s19, 2
      // Predicated region
      $region21: #{tpu_custom_call.1} parent=5 // pred_check
        %p183 = pneg %p182
      $region22: #{tpu_custom_call.1} parent=5 // pred_check_branch
        %185 = sbr.rel (%p183) target = $region24
      $region23: #{tpu_custom_call.1} parent=5 // pred_region
        // Predicated region
        $region25: #{tpu_custom_call.1} parent=23 // pred_check
          %p186 = pneg %p95
        $region26: #{tpu_custom_call.1} parent=23 // pred_check_branch
          %188 = sbr.rel (%p186) target = $region28
        $region27: #{tpu_custom_call.1} parent=23 // pred_region
          %s189 = sand.u32 %s85, 1
          %s190 = scalar_lea.sflag [#allocation3], %s189
          %s191 = sand.u32 %s85, 1
          %s192 = smul.addr %s191, 12
          %s193 = scalar_lea.vmem [#allocation2], %s192
          %s194 = smul.u32 3, %s27
          %s195 = ssub.s32 4, %s194
          %p196 = scmp.lt.s32.totalorder %s195, 3
          %s197 = scalar_select %p196, %s195, 3
          %s198 = smul.u32 4, %s197
          %s199 = ssub.s32 12, %s198
          %s200 = sshll.u32 %s199, 4
          %201 = vsyncadd %s190, %s200
          %p202 = scmp.ne.s32.totalorder 0, %s198
          %s203 = smul.addr %s26, 4
          %s204 = sadd.s32 %s194, %s203
          %s205 = smul.addr %s204, 4
          %s206 = scalar_lea.hbm %s2, %s205
          %s207 = smul.u32 %s197, 4
          %s208 = sshll.u32 %s207, 4
          %s209 = sshll.u32 %s206, 4
          %s210 = int_to_ptr.hbm [resolvable:$true] %s209
          %s211 = sshll.u32 %s193, 4
          %s212 = int_to_ptr.vmem [resolvable:$true] %s211
          %214 = dma.hbm_to_vmem [thread:$0]  (%p202), %s210, %s208, %s212, %s190
        $region28: #{tpu_custom_call.1} parent=23 // pred_fallthru
          _
        // Predicated region
        $region29: #{tpu_custom_call.1} parent=23 // pred_check
          %p215 = pneg %p127
        $region30: #{tpu_custom_call.1} parent=23 // pred_check_branch
          %217 = sbr.rel (%p215) target = $region32
        $region31: #{tpu_custom_call.1} parent=23 // pred_region
          %s218 = sand.u32 %s117, 1
          %s219 = scalar_lea.sflag [#allocation6], %s218
          %s220 = sand.u32 %s117, 1
          %s221 = smul.addr %s220, 4
          %s222 = scalar_lea.vmem [#allocation5], %s221
          %s223 = sadd.s32 %s27, 1
          %s224 = smul.u32 %s223, 3
          %226 = vsyncadd %s219, 0
          %s227 = smul.addr %s26, 4
          %s228 = sadd.s32 %s224, %s227
          %s229 = smul.addr %s228, 4
          %s230 = scalar_lea.hbm %s3, %s229
          %s232 = sshll.u32 %s230, 4
          %s233 = int_to_ptr.hbm [resolvable:$true] %s232
          %s234 = sshll.u32 %s222, 4
          %s235 = int_to_ptr.vmem [resolvable:$true] %s234
          %237 = dma.hbm_to_vmem [thread:$0]  %s233, 64, %s235, %s219
        $region32: #{tpu_custom_call.1} parent=23 // pred_fallthru
          _
      $region24: #{tpu_custom_call.1} parent=5 // pred_fallthru
        _
      %p238 = scmp.le.s32.totalorder 1, %s19
      %p239 = scmp.lt.s32.totalorder %s19, 3
      %p240 = pnand %p238, %p239
      %p241 = pneg %p240
      // Predicated region
      $region33: #{tpu_custom_call.1} parent=5 // pred_check
        _
      $region34: #{tpu_custom_call.1} parent=5 // pred_check_branch
        %243 = sbr.rel (%p240) target = $region36
      $region35: #{tpu_custom_call.1} parent=5 // pred_region
        %s244 = ssub.s32 %s19, 1
        %s245 = sand.u32 %s88, 1
        %s246 = scalar_lea.sflag [#allocation3], %s245
        %s247 = sand.u32 %s88, 1
        %s248 = smul.addr %s247, 12
        %s249 = scalar_lea.vmem [#allocation2], %s248
        // Predicated region
        $region37: #{tpu_custom_call.1} parent=35 // pred_check
          %p250 = pneg %p101
        $region38: #{tpu_custom_call.1} parent=35 // pred_check_branch
          %252 = sbr.rel (%p250) target = $region40
        $region39: #{tpu_custom_call.1} parent=35 // pred_region
          %254 = dma.done %s246, 192
        $region40: #{tpu_custom_call.1} parent=35 // pred_fallthru
          _
        %s255 = sand.u32 %s120, 1
        %s256 = scalar_lea.sflag [#allocation6], %s255
        %s257 = sand.u32 %s120, 1
        %s258 = smul.addr %s257, 4
        %s259 = scalar_lea.vmem [#allocation5], %s258
        // Predicated region
        $region41: #{tpu_custom_call.1} parent=35 // pred_check
          %p260 = pneg %p133
        $region42: #{tpu_custom_call.1} parent=35 // pred_check_branch
          %262 = sbr.rel (%p260) target = $region44
        $region43: #{tpu_custom_call.1} parent=35 // pred_region
          %264 = dma.done %s256, 64
        $region44: #{tpu_custom_call.1} parent=35 // pred_fallthru
          _
        %p265 = pneg %p52
        %p266 = pneg %p49
        %p267 = pneg %p73
        %p268 = pneg %p70
        %s269 = sand.u32 %s88, 1
        %s270 = scalar_lea.sflag [#allocation3], %s269
        %s271 = sand.u32 %s88, 1
        %s272 = smul.addr %s271, 12
        %s273 = scalar_lea.vmem [#allocation2], %s272
        %p274 = pneg %p101
        %p275 = pneg %p98
        %s276 = sand.u32 %s120, 1
        %s277 = scalar_lea.sflag [#allocation6], %s276
        %s278 = sand.u32 %s120, 1
        %s279 = smul.addr %s278, 4
        %s280 = scalar_lea.vmem [#allocation5], %s279
        %p281 = pneg %p133
        %p282 = pneg %p130
        %p283 = pneg %p161
        %p284 = pneg %p158
        %s285 = sand.u32 %s148, 1
        %s286 = scalar_lea.sflag [#allocation4], %s285
        %s287 = sand.u32 %s148, 1
        %s288 = smul.addr %s287, 24
        %s289 = scalar_lea.vmem [#allocation7], %s288
        %s290 = smul.u32 3, %s29
        %s291 = ssub.s32 4, %s290
        %p292 = scmp.lt.s32.totalorder %s291, 3
        %s293 = scalar_select %p292, %s291, 3
        %s294 = smul.u32 4, %s293
        %s295 = sadd.s32 %s29, 1
        %s296 = smul.u32 %s295, 3
        %s297 = smul.u32 3, %s29
        %v298 = vld [vmem:[%s249] sm:$0xff]
        %v299 = vld [vmem:[%s249 + $0x8] sm:$0xf]
        %v300 = vld [vmem:[%s259] sm:$0xf]
        %303 = vst [vmem:[#allocation1] ss:$2 sm:$0xff] %v298
        %s304 = scalar_lea.vmem [#allocation1], 16
        %305 = vst [vmem:[%s304] ss:$2 sm:$0xff] %v299
        %v306 = vld.sshfl [vmem:[#allocation1] sm:$0xff pattern:$0x75316420]
        %v307 = vld.sshfl [vmem:[#allocation1 + $0x8] sm:$0xff pattern:$0x75316420]
        %v308 = vld.sshfl [vmem:[#allocation1 + $0x10] sm:$0xff pattern:$0x75316420]
        %v313 = vrot.slane %v306, 4
        %v314 = vrot.slane %v307, 4
        %v315 = vrot.slane %v308, 4
        %v316 = vrot.slane %v300, 4
        %317 = vrot.lane.b32.xlu0 %v313, 127
        %v318 = vpop.permute.xlu0 %317
        %319 = vrot.lane.b32.xlu0 %v314, 127
        %v320 = vpop.permute.xlu0 %319
        %321 = vrot.lane.b32.xlu0 %v315, 127
        %v322 = vpop.permute.xlu0 %321
        %323 = vrot.lane.b32.xlu0 %v316, 127
        %v324 = vpop.permute.xlu0 %323
        %vm325 = vcmask 1039360
        %v326 = vsel %vm325, %v318, %v320
        %v327 = vsel %vm325, %v320, %v322
        %v328 = vsel %vm325, %v322, %v324
        %332 = vrot.lane.b32.xlu0 %v306, 126
        %v333 = vpop.permute.xlu0 %332
        %334 = vrot.lane.b32.xlu0 %v307, 126
        %v335 = vpop.permute.xlu0 %334
        %336 = vrot.lane.b32.xlu0 %v308, 126
        %v337 = vpop.permute.xlu0 %336
        %338 = vrot.lane.b32.xlu0 %v300, 126
        %v339 = vpop.permute.xlu0 %338
        %vm340 = vcmask 1031168
        %v341 = vsel %vm340, %v333, %v335
        %v342 = vsel %vm340, %v335, %v337
        %v343 = vsel %vm340, %v337, %v339
        %347 = vrot.lane.b32.xlu0 %v313, 110
        %v348 = vpop.permute.xlu0 %347
        %349 = vrot.lane.b32.xlu0 %v314, 110
        %v350 = vpop.permute.xlu0 %349
        %351 = vrot.lane.b32.xlu0 %v315, 110
        %v352 = vpop.permute.xlu0 %351
        %353 = vrot.lane.b32.xlu0 %v316, 110
        %v354 = vpop.permute.xlu0 %353
        %vm355 = vcmask 900096
        %v356 = vsel %vm355, %v348, %v350
        %v357 = vsel %vm355, %v350, %v352
        %v358 = vsel %vm355, %v352, %v354
        %362 = vrot.lane.b32.xlu0 %v306, 109
        %v363 = vpop.permute.xlu0 %362
        %364 = vrot.lane.b32.xlu0 %v307, 109
        %v365 = vpop.permute.xlu0 %364
        %366 = vrot.lane.b32.xlu0 %v308, 109
        %v367 = vpop.permute.xlu0 %366
        %368 = vrot.lane.b32.xlu0 %v300, 109
        %v369 = vpop.permute.xlu0 %368
        %vm370 = vcmask 891904
        %v371 = vsel %vm370, %v363, %v365
        %v372 = vsel %vm370, %v365, %v367
        %v373 = vsel %vm370, %v367, %v369
        %377 = vrot.lane.b32.xlu0 %v313, 108
        %v378 = vpop.permute.xlu0 %377
        %379 = vrot.lane.b32.xlu0 %v314, 108
        %v380 = vpop.permute.xlu0 %379
        %381 = vrot.lane.b32.xlu0 %v315, 108
        %v382 = vpop.permute.xlu0 %381
        %383 = vrot.lane.b32.xlu0 %v316, 108
        %v384 = vpop.permute.xlu0 %383
        %vm385 = vcmask 883712
        %v386 = vsel %vm385, %v378, %v380
        %v387 = vsel %vm385, %v380, %v382
        %v388 = vsel %vm385, %v382, %v384
        %392 = vrot.lane.b32.xlu0 %v306, 92
        %v393 = vpop.permute.xlu0 %392
        %394 = vrot.lane.b32.xlu0 %v307, 92
        %v395 = vpop.permute.xlu0 %394
        %396 = vrot.lane.b32.xlu0 %v308, 92
        %v397 = vpop.permute.xlu0 %396
        %398 = vrot.lane.b32.xlu0 %v300, 92
        %v399 = vpop.permute.xlu0 %398
        %vm400 = vcmask 752640
        %v401 = vsel %vm400, %v393, %v395
        %v402 = vsel %vm400, %v395, %v397
        %v403 = vsel %vm400, %v397, %v399
        %407 = vrot.lane.b32.xlu0 %v313, 91
        %v408 = vpop.permute.xlu0 %407
        %409 = vrot.lane.b32.xlu0 %v314, 91
        %v410 = vpop.permute.xlu0 %409
        %411 = vrot.lane.b32.xlu0 %v315, 91
        %v412 = vpop.permute.xlu0 %411
        %413 = vrot.lane.b32.xlu0 %v316, 91
        %v414 = vpop.permute.xlu0 %413
        %vm415 = vcmask 744448
        %v416 = vsel %vm415, %v408, %v410
        %v417 = vsel %vm415, %v410, %v412
        %v418 = vsel %vm415, %v412, %v414
        %422 = vrot.lane.b32.xlu0 %v306, 90
        %v423 = vpop.permute.xlu0 %422
        %424 = vrot.lane.b32.xlu0 %v307, 90
        %v425 = vpop.permute.xlu0 %424
        %426 = vrot.lane.b32.xlu0 %v308, 90
        %v427 = vpop.permute.xlu0 %426
        %428 = vrot.lane.b32.xlu0 %v300, 90
        %v429 = vpop.permute.xlu0 %428
        %vm430 = vcmask 736256
        %v431 = vsel %vm430, %v423, %v425
        %v432 = vsel %vm430, %v425, %v427
        %v433 = vsel %vm430, %v427, %v429
        %vm434 = vcmask 1043456
        %v435 = vsel %vm434, %v306, %v326
        %v436 = vsel %vm434, %v307, %v327
        %v437 = vsel %vm434, %v308, %v328
        %v438 = vsel %vm434, %v341, %v356
        %v439 = vsel %vm434, %v342, %v357
        %v440 = vsel %vm434, %v343, %v358
        %v441 = vsel %vm434, %v371, %v386
        %v442 = vsel %vm434, %v372, %v387
        %v443 = vsel %vm434, %v373, %v388
        %v444 = vsel %vm434, %v401, %v416
        %v445 = vsel %vm434, %v402, %v417
        %v446 = vsel %vm434, %v403, %v418
        %v447 = vld [vmem:[%s0] sm:$0xff]
        %v448 = vld [vmem:[%s1] sm:$0xff]
        %450 = vset.pattern.permute.xlu0 0
        %451 = vperm.xlu0 %450, %v448
        %v452 = vpop.permute.xlu0 %451
        %vm454 = vcmask 293888
        %v456 = vsel %vm454, %v447, 0
        %v458 = vsel %vm434, %v431, 0
        %v460 = vsel %vm434, %v432, 0
        %v462 = vsel %vm434, %v433, 0
        %464 = vmatpush.msra.mxu0 0.0
        %465 = vmatpush.msra.mxu0 0.0
        %466 = vmatpush.msra.mxu0 0.0
        %467 = vmatpush.msra.mxu0 0.0
        %468 = vmatpush.msra.mxu0 0.0
        %469 = vmatpush.msra.mxu0 0.0
        %470 = vmatpush.msra.mxu0 0.0
        %471 = vmatpush.msra.mxu0 0.0
        %472 = vmatpush.msra.mxu0 0.0
        %473 = vmatpush.msra.mxu0 0.0
        %474 = vmatpush.msra.mxu0 0.0
        %475 = vmatpush.msra.mxu0 %v458
        %476 = vmatpush.msra.mxu0 %v444
        %477 = vmatpush.msra.mxu0 %v441
        %478 = vmatpush.msra.mxu0 %v438
        %479 = vmatpush.msra.mxu0 %v435
        %480 = vmatmul.f32.gmra.mxu0 %v456
        %v481 = vpop.f32.mrf.mxu0
        %v482 = vadd.f32 %v452, %v481
        %483 = vdwg.mxu0
        %484 = vmatpush.msra.mxu0 0.0
        %485 = vmatpush.msra.mxu0 0.0
        %486 = vmatpush.msra.mxu0 0.0
        %487 = vmatpush.msra.mxu0 0.0
        %488 = vmatpush.msra.mxu0 0.0
        %489 = vmatpush.msra.mxu0 0.0
        %490 = vmatpush.msra.mxu0 0.0
        %491 = vmatpush.msra.mxu0 0.0
        %492 = vmatpush.msra.mxu0 0.0
        %493 = vmatpush.msra.mxu0 0.0
        %494 = vmatpush.msra.mxu0 0.0
        %495 = vmatpush.msra.mxu0 %v460
        %496 = vmatpush.msra.mxu0 %v445
        %497 = vmatpush.msra.mxu0 %v442
        %498 = vmatpush.msra.mxu0 %v439
        %499 = vmatpush.msra.mxu0 %v436
        %500 = vmatmul.f32.gmra.mxu0 %v456
        %v501 = vpop.f32.mrf.mxu0
        %v502 = vadd.f32 %v452, %v501
        %503 = vdwg.mxu0
        %504 = vmatpush.msra.mxu0 0.0
        %505 = vmatpush.msra.mxu0 0.0
        %506 = vmatpush.msra.mxu0 0.0
        %507 = vmatpush.msra.mxu0 0.0
        %508 = vmatpush.msra.mxu0 0.0
        %509 = vmatpush.msra.mxu0 0.0
        %510 = vmatpush.msra.mxu0 0.0
        %511 = vmatpush.msra.mxu0 0.0
        %512 = vmatpush.msra.mxu0 0.0
        %513 = vmatpush.msra.mxu0 0.0
        %514 = vmatpush.msra.mxu0 0.0
        %515 = vmatpush.msra.mxu0 %v462
        %516 = vmatpush.msra.mxu0 %v446
        %517 = vmatpush.msra.mxu0 %v443
        %518 = vmatpush.msra.mxu0 %v440
        %519 = vmatpush.msra.mxu0 %v437
        %520 = vmatmul.f32.gmra.mxu0 %v456
        %v521 = vpop.f32.mrf.mxu0
        %v522 = vadd.f32 %v452, %v521
        %523 = vdwg.mxu0
        %v524 = vmul.f32 %v482, 0.5
        %v525 = vmul.f32 %v502, 0.5
        %v526 = vmul.f32 %v522, 0.5
        %v527 = vtanh.pop %v524
        %v528 = vtanh.pop %v525
        %v529 = vtanh.pop %v526
        %v530 = vmul.f32 %v527, 0.5
        %v531 = vmul.f32 %v528, 0.5
        %v532 = vmul.f32 %v529, 0.5
        %v533 = vadd.f32 %v530, 0.5
        %v534 = vadd.f32 %v531, 0.5
        %v535 = vadd.f32 %v532, 0.5
        %536 = vst [vmem:[%s289] sm:$0xff] %v533
        %537 = vst [vmem:[%s289 + $0x8] sm:$0xff] %v534
        %538 = vst [vmem:[%s289 + $0x10] sm:$0xff] %v535
        %s539 = sand.u32 %s148, 1
        %s540 = scalar_lea.sflag [#allocation4], %s539
        %s541 = sand.u32 %s148, 1
        %s542 = smul.addr %s541, 24
        %s543 = scalar_lea.vmem [#allocation7], %s542
        // Predicated region
        $region45: #{tpu_custom_call.1} parent=35 // pred_check
          %p544 = pneg %p158
        $region46: #{tpu_custom_call.1} parent=35 // pred_check_branch
          %546 = sbr.rel (%p544) target = $region48
        $region47: #{tpu_custom_call.1} parent=35 // pred_region
          %s547 = smul.u32 3, %s29
          %549 = vsyncadd %s540, 0
          %s550 = smul.addr %s28, 3
          %s551 = sadd.s32 %s547, %s550
          %s552 = smul.addr %s551, 8
          %s553 = scalar_lea.hbm %s4, %s552
          %s555 = sshll.u32 %s543, 4
          %s556 = int_to_ptr.vmem [resolvable:$true] %s555
          %s557 = sshll.u32 %s553, 4
          %s558 = int_to_ptr.hbm [resolvable:$true] %s557
          %560 = dma.vmem_to_hbm [thread:$0]  %s556, 384, %s558, %s540
        $region48: #{tpu_custom_call.1} parent=35 // pred_fallthru
          _
      $region36: #{tpu_custom_call.1} parent=5 // pred_fallthru
        _
      %p561 = scmp.le.s32.totalorder 2, %s19
      // Predicated region
      $region49: #{tpu_custom_call.1} parent=5 // pred_check
        %p562 = pneg %p561
      $region50: #{tpu_custom_call.1} parent=5 // pred_check_branch
        %564 = sbr.rel (%p562) target = $region52
      $region51: #{tpu_custom_call.1} parent=5 // pred_region
        %s565 = ssub.s32 %s19, 2
        // Predicated region
        $region53: #{tpu_custom_call.1} parent=51 // pred_check
          %p566 = pneg %p164
        $region54: #{tpu_custom_call.1} parent=51 // pred_check_branch
          %568 = sbr.rel (%p566) target = $region56
        $region55: #{tpu_custom_call.1} parent=51 // pred_region
          %s569 = sand.u32 %s149, 1
          %s570 = scalar_lea.sflag [#allocation4], %s569
          %s571 = sand.u32 %s149, 1
          %s572 = smul.addr %s571, 24
          %s573 = scalar_lea.vmem [#allocation7], %s572
          %575 = dma.done %s570, 384
        $region56: #{tpu_custom_call.1} parent=51 // pred_fallthru
          _
      $region52: #{tpu_custom_call.1} parent=5 // pred_fallthru
        _
    $region6: #{tpu_custom_call.1} parent=1 // loop_footer
      %s23 = sadd.s32 1, %s19
    $region7: #{tpu_custom_call.1} parent=1 // loop_footer_branch
      %18 = sbr.rel target = $region3
    $region8: #{tpu_custom_call.1} parent=1 // loop_exit
      _
    %576 = vsyncpa [#allocation3], 1
    %s577 = scalar_lea.sflag [#allocation3], 1
    %578 = vsyncpa %s577, 1
    %579 = vsyncpa [#allocation6], 1
    %s580 = scalar_lea.sflag [#allocation6], 1
    %581 = vsyncpa %s580, 1
    %582 = vsyncpa [#allocation4], 1
    %s583 = scalar_lea.sflag [#allocation4], 1
    %584 = vsyncpa %s583, 1

</llo_original>
